<compile_context>
chip_gen: v7x
topology: tpu7x:2x2x1
jax: 0.10.0
libtpu: 0.0.40
codegen_flags: <defaults>
</compile_context>

<pallas_src>
import jax
import jax.numpy as jnp
from jax.experimental import pallas as pl
from jax.experimental.pallas import tpu as pltpu


def mlp_kernel(x_ref, w1_ref, b1_ref, w2_ref, b2_ref, w3_ref, b3_ref,
               w4_ref, b4_ref, o_ref):
    # x_ref: (1, tb) -- batch on the lane axis.  All activations are (features, tb).
    x = x_ref[...]                                                     # (1, tb)

    # Layer 1: 1 -> 128.  K=1 matmul replaced by a VPU broadcast multiply.
    h = jnp.maximum(w1_ref[...] * x + b1_ref[...], 0.0)               # (128, tb)

    # Layer 2: 128 -> 128.  (out,in) @ (in,tb) on the MXU, f32 accumulation.
    h = jnp.dot(w2_ref[...], h, preferred_element_type=jnp.float32)
    h = jnp.maximum(h + b2_ref[...], 0.0)                             # (128, tb)

    # Layer 3: 128 -> 64.
    h = jnp.dot(w3_ref[...], h, preferred_element_type=jnp.float32)
    h = jnp.maximum(h + b3_ref[...], 0.0)                             # (64, tb)

    # Layer 4: 64 -> 1.  N=1 matmul replaced by multiply + sublane reduce (VPU + XLU).
    o_ref[...] = jnp.sum(w4_ref[...] * h, axis=0, keepdims=True) + b4_ref[...]  # (1, tb)


def complex_nn_forward(x, params, *, tb=256):
    """x: (B, 1) float32 (PyTorch Linear layout).  Returns (B, 1) float32.

    params (PyTorch-native (out, in) weights except w4, biases as (out, 1) columns):
      w1 (128,1) b1 (128,1) w2 (128,128) b2 (128,1) w3 (64,128) b3 (64,1)
      w4 (64,1)  b4 (1,1)      (w4 stored as a column = fc4.weight.T for the reduce path)
    """
    B = x.shape[0]
    tb = min(tb, B)
    assert B % tb == 0 and (tb % 128 == 0 or tb == B), "batch tile must be lane-aligned"
    w1, b1, w2, b2, w3, b3, w4, b4 = (params[k] for k in
                                      ("w1", "b1", "w2", "b2", "w3", "b3", "w4", "b4"))

    def full(arr):
        # Whole parameter resident in VMEM for every batch tile (constant index_map).
        return pl.BlockSpec(arr.shape, lambda i: (0, 0))

    x_lanes = x.reshape(1, B)   # batch-in-lanes presentation (pure layout plumbing)

    out = pl.pallas_call(
        mlp_kernel,
        out_shape=jax.ShapeDtypeStruct((1, B), jnp.float32),
        grid_spec=pltpu.PrefetchScalarGridSpec(
            num_scalar_prefetch=0,
            grid=(B // tb,),
            in_specs=[
                pl.BlockSpec((1, tb), lambda i: (0, i)),   # x tile: batch on lanes
                full(w1), full(b1),
                full(w2), full(b2),
                full(w3), full(b3),
                full(w4), full(b4),
            ],
            out_specs=pl.BlockSpec((1, tb), lambda i: (0, i)),  # lane-dense output
        ),
        compiler_params=pltpu.CompilerParams(
            dimension_semantics=("parallel",)),   # v7x: 2 TCs split the batch grid
    )(x_lanes, w1, b1, w2, b2, w3, b3, w4, b4)

    return out.reshape(B, 1)


def init_params(key):
    """Deterministic init matching nn.Linear (weights (out,in), biases (out,1))."""
    sizes = [(1, 128), (128, 128), (128, 64), (64, 1)]   # (fan_in, fan_out)
    params = {}
    for n, (fan_in, fan_out) in enumerate(sizes, start=1):
        key, kw, kb = jax.random.split(key, 3)
        bound = 1.0 / jnp.sqrt(fan_in)
        if n == 4:
            # Final layer stored as a column (in, out) = (64, 1) for the reduce path.
            w = jax.random.uniform(kw, (fan_in, fan_out), jnp.float32, -bound, bound)
        else:
            w = jax.random.uniform(kw, (fan_out, fan_in), jnp.float32, -bound, bound)
        params[f"w{n}"] = w
        params[f"b{n}"] = jax.random.uniform(kb, (fan_out, 1), jnp.float32, -bound, bound)
    return params


def reference_forward(x, params):
    """Row-major reference matching torch semantics. x: (B,1) -> (B,1)."""
    h = jnp.maximum(x @ params["w1"].T + params["b1"].T, 0.0)
    h = jnp.maximum(h @ params["w2"].T + params["b2"].T, 0.0)
    h = jnp.maximum(h @ params["w3"].T + params["b3"].T, 0.0)
    return h @ params["w4"] + params["b4"].T


if __name__ == "__main__":
    key = jax.random.PRNGKey(0)
    kp, kx = jax.random.split(key)
    params = init_params(kp)

    B = 512                                   # 2 lane-aligned grid steps of tb=256
    x = jax.random.normal(kx, (B, 1), jnp.float32)

    out = complex_nn_forward(x, params, tb=256)
    out = jax.block_until_ready(out)

    ref = reference_forward(x, params)
    assert out.shape == (B, 1)
    assert jnp.allclose(out, ref, atol=1e-4, rtol=1e-4)
    print("KERNEL_OK")
</pallas_src>

<mosaic_0001>
module attributes {stable_mosaic.version = 11 : i64} {
  func.func @mlp_kernel(%arg0: i32, %arg1: memref<1x256xf32, #tpu.memory_space<vmem>>, %arg2: memref<128x1xf32, #tpu.memory_space<vmem>>, %arg3: memref<128x1xf32, #tpu.memory_space<vmem>>, %arg4: memref<128x128xf32, #tpu.memory_space<vmem>>, %arg5: memref<128x1xf32, #tpu.memory_space<vmem>>, %arg6: memref<64x128xf32, #tpu.memory_space<vmem>>, %arg7: memref<64x1xf32, #tpu.memory_space<vmem>>, %arg8: memref<64x1xf32, #tpu.memory_space<vmem>>, %arg9: memref<1x1xf32, #tpu.memory_space<vmem>>, %arg10: memref<1x256xf32, #tpu.memory_space<vmem>>) attributes {dimension_semantics = [#tpu.dimension_semantics<parallel>], iteration_bounds = array<i64: 2>, scalar_prefetch = 0 : i64, scratch_operands = 0 : i64, tpu.core_type = #tpu.core_type<tc>, window_params = [{transform_indices = @transform_0, window_bounds = array<i64: 1, 256>}, {pipeline_mode = #tpu.pipeline_mode<synchronous>, transform_indices = @transform_1, window_bounds = array<i64: 128, 1>}, {pipeline_mode = #tpu.pipeline_mode<synchronous>, transform_indices = @transform_2, window_bounds = array<i64: 128, 1>}, {pipeline_mode = #tpu.pipeline_mode<synchronous>, transform_indices = @transform_3, window_bounds = array<i64: 128, 128>}, {pipeline_mode = #tpu.pipeline_mode<synchronous>, transform_indices = @transform_4, window_bounds = array<i64: 128, 1>}, {pipeline_mode = #tpu.pipeline_mode<synchronous>, transform_indices = @transform_5, window_bounds = array<i64: 64, 128>}, {pipeline_mode = #tpu.pipeline_mode<synchronous>, transform_indices = @transform_6, window_bounds = array<i64: 64, 1>}, {pipeline_mode = #tpu.pipeline_mode<synchronous>, transform_indices = @transform_7, window_bounds = array<i64: 64, 1>}, {pipeline_mode = #tpu.pipeline_mode<synchronous>, transform_indices = @transform_8, window_bounds = array<i64: 1, 1>}, {transform_indices = @transform_9, window_bounds = array<i64: 1, 256>}]} {
    %c0 = arith.constant 0 : index
    %c0_0 = arith.constant 0 : index
    %0 = vector.load %arg1[%c0, %c0_0] : memref<1x256xf32, #tpu.memory_space<vmem>>, vector<1x256xf32>
    %c0_1 = arith.constant 0 : index
    %c0_2 = arith.constant 0 : index
    %1 = vector.load %arg2[%c0_1, %c0_2] : memref<128x1xf32, #tpu.memory_space<vmem>>, vector<128x1xf32>
    %2 = vector.broadcast %1 : vector<128x1xf32> to vector<128x256xf32>
    %3 = vector.broadcast %0 : vector<1x256xf32> to vector<128x256xf32>
    %4 = arith.mulf %2, %3 : vector<128x256xf32>
    %c0_3 = arith.constant 0 : index
    %c0_4 = arith.constant 0 : index
    %5 = vector.load %arg3[%c0_3, %c0_4] : memref<128x1xf32, #tpu.memory_space<vmem>>, vector<128x1xf32>
    %6 = vector.broadcast %5 : vector<128x1xf32> to vector<128x256xf32>
    %7 = arith.addf %4, %6 : vector<128x256xf32>
    %cst = arith.constant 0.000000e+00 : f32
    %8 = vector.broadcast %cst : f32 to vector<128x256xf32>
    %9 = arith.maximumf %7, %8 : vector<128x256xf32>
    %c0_5 = arith.constant 0 : index
    %c0_6 = arith.constant 0 : index
    %10 = vector.load %arg4[%c0_5, %c0_6] : memref<128x128xf32, #tpu.memory_space<vmem>>, vector<128x128xf32>
    %cst_7 = arith.constant dense<0.000000e+00> : vector<128x256xf32>
    %11 = tpu.matmul %10, %9, %cst_7 {dimension_numbers = #tpu.dot_dimension_numbers<[1], [0], [0], [1], [0, 0, 1, 1], [], []>} : vector<128x128xf32>, vector<128x256xf32>, vector<128x256xf32> -> vector<128x256xf32>
    %c0_8 = arith.constant 0 : index
    %c0_9 = arith.constant 0 : index
    %12 = vector.load %arg5[%c0_8, %c0_9] : memref<128x1xf32, #tpu.memory_space<vmem>>, vector<128x1xf32>
    %13 = vector.broadcast %12 : vector<128x1xf32> to vector<128x256xf32>
    %14 = arith.addf %11, %13 : vector<128x256xf32>
    %cst_10 = arith.constant 0.000000e+00 : f32
    %15 = vector.broadcast %cst_10 : f32 to vector<128x256xf32>
    %16 = arith.maximumf %14, %15 : vector<128x256xf32>
    %c0_11 = arith.constant 0 : index
    %c0_12 = arith.constant 0 : index
    %17 = vector.load %arg6[%c0_11, %c0_12] : memref<64x128xf32, #tpu.memory_space<vmem>>, vector<64x128xf32>
    %cst_13 = arith.constant dense<0.000000e+00> : vector<64x256xf32>
    %18 = tpu.matmul %17, %16, %cst_13 {dimension_numbers = #tpu.dot_dimension_numbers<[1], [0], [0], [1], [0, 0, 1, 1], [], []>} : vector<64x128xf32>, vector<128x256xf32>, vector<64x256xf32> -> vector<64x256xf32>
    %c0_14 = arith.constant 0 : index
    %c0_15 = arith.constant 0 : index
    %19 = vector.load %arg7[%c0_14, %c0_15] : memref<64x1xf32, #tpu.memory_space<vmem>>, vector<64x1xf32>
    %20 = vector.broadcast %19 : vector<64x1xf32> to vector<64x256xf32>
    %21 = arith.addf %18, %20 : vector<64x256xf32>
    %cst_16 = arith.constant 0.000000e+00 : f32
    %22 = vector.broadcast %cst_16 : f32 to vector<64x256xf32>
    %23 = arith.maximumf %21, %22 : vector<64x256xf32>
    %c0_17 = arith.constant 0 : index
    %c0_18 = arith.constant 0 : index
    %24 = vector.load %arg8[%c0_17, %c0_18] : memref<64x1xf32, #tpu.memory_space<vmem>>, vector<64x1xf32>
    %25 = vector.broadcast %24 : vector<64x1xf32> to vector<64x256xf32>
    %26 = arith.mulf %25, %23 : vector<64x256xf32>
    %cst_19 = arith.constant dense<0.000000e+00> : vector<256xf32>
    %27 = vector.multi_reduction <add>, %26, %cst_19 [0] : vector<64x256xf32> to vector<256xf32>
    %28 = vector.shape_cast %27 : vector<256xf32> to vector<1x256xf32>
    %c0_20 = arith.constant 0 : index
    %c0_21 = arith.constant 0 : index
    %29 = vector.load %arg9[%c0_20, %c0_21] : memref<1x1xf32, #tpu.memory_space<vmem>>, vector<1x1xf32>
    %30 = vector.broadcast %29 : vector<1x1xf32> to vector<1x256xf32>
    %31 = arith.addf %28, %30 : vector<1x256xf32>
    %c0_22 = arith.constant 0 : index
    %c0_23 = arith.constant 0 : index
    %32 = vector.load %arg10[%c0_22, %c0_23] : memref<1x256xf32, #tpu.memory_space<vmem>>, vector<1x256xf32>
    tpu.vector_store %arg10[%c0_22, %c0_23], %31 {strides = array<i32>} : memref<1x256xf32, #tpu.memory_space<vmem>>, vector<1x256xf32>,
    return
  }
  func.func @transform_0(%arg0: i32) -> (i32, i32) {
    %c0_i32 = arith.constant 0 : i32
    %c0_i32_0 = arith.constant 0 : i32
    return %c0_i32, %arg0 : i32, i32
  }
  func.func @transform_1(%arg0: i32) -> (i32, i32) {
    %c0_i32 = arith.constant 0 : i32
    %c0_i32_0 = arith.constant 0 : i32
    %c0_i32_1 = arith.constant 0 : i32
    return %c0_i32, %c0_i32_0 : i32, i32
  }
  func.func @transform_2(%arg0: i32) -> (i32, i32) {
    %c0_i32 = arith.constant 0 : i32
    %c0_i32_0 = arith.constant 0 : i32
    %c0_i32_1 = arith.constant 0 : i32
    return %c0_i32, %c0_i32_0 : i32, i32
  }
  func.func @transform_3(%arg0: i32) -> (i32, i32) {
    %c0_i32 = arith.constant 0 : i32
    %c0_i32_0 = arith.constant 0 : i32
    %c0_i32_1 = arith.constant 0 : i32
    return %c0_i32, %c0_i32_0 : i32, i32
  }
  func.func @transform_4(%arg0: i32) -> (i32, i32) {
    %c0_i32 = arith.constant 0 : i32
    %c0_i32_0 = arith.constant 0 : i32
    %c0_i32_1 = arith.constant 0 : i32
    return %c0_i32, %c0_i32_0 : i32, i32
  }
  func.func @transform_5(%arg0: i32) -> (i32, i32) {
    %c0_i32 = arith.constant 0 : i32
    %c0_i32_0 = arith.constant 0 : i32
    %c0_i32_1 = arith.constant 0 : i32
    return %c0_i32, %c0_i32_0 : i32, i32
  }
  func.func @transform_6(%arg0: i32) -> (i32, i32) {
    %c0_i32 = arith.constant 0 : i32
    %c0_i32_0 = arith.constant 0 : i32
    %c0_i32_1 = arith.constant 0 : i32
    return %c0_i32, %c0_i32_0 : i32, i32
  }
  func.func @transform_7(%arg0: i32) -> (i32, i32) {
    %c0_i32 = arith.constant 0 : i32
    %c0_i32_0 = arith.constant 0 : i32
    %c0_i32_1 = arith.constant 0 : i32
    return %c0_i32, %c0_i32_0 : i32, i32
  }
  func.func @transform_8(%arg0: i32) -> (i32, i32) {
    %c0_i32 = arith.constant 0 : i32
    %c0_i32_0 = arith.constant 0 : i32
    %c0_i32_1 = arith.constant 0 : i32
    return %c0_i32, %c0_i32_0 : i32, i32
  }
  func.func @transform_9(%arg0: i32) -> (i32, i32) {
    %c0_i32 = arith.constant 0 : i32
    %c0_i32_0 = arith.constant 0 : i32
    return %c0_i32, %arg0 : i32, i32
  }
}

</mosaic_0001>

<llo_original>
// kernel: tpu_custom_call.1
$region0: #{tpu_custom_call.1}
  #allocation0 [shape = 'u32[]', space=smem, size = 0x4, offset = 0x4, fixed_abs, tag = 'smem constant byte address 0x4 - core index']
  #allocation1 [shape = 'u32[144,128]{1,0:T(1,128)}', space=vmem, size = 0x12000, scoped, tag = 'internal scratch']
  #allocation2 [shape = 'f32[1,1]{1,0:T(1,128)S(1)}', space=vmem, size = 0x200, scoped, tag = 'scoped memory for tpu_custom_call.1']
  %s0 = inlined_call_operand.vmem [shape: f32[1,512], index: 0, kind: input, shape index: {}]
  %s1 = inlined_call_operand.vmem [shape: f32[128,1], index: 1, kind: input, shape index: {}]
  %s2 = inlined_call_operand.vmem [shape: f32[128,1], index: 2, kind: input, shape index: {}]
  %s3 = inlined_call_operand.vmem [shape: f32[128,128], index: 3, kind: input, shape index: {}]
  %s4 = inlined_call_operand.vmem [shape: f32[128,1], index: 4, kind: input, shape index: {}]
  %s5 = inlined_call_operand.vmem [shape: f32[64,128], index: 5, kind: input, shape index: {}]
  %s6 = inlined_call_operand.vmem [shape: f32[64,1], index: 6, kind: input, shape index: {}]
  %s7 = inlined_call_operand.vmem [shape: f32[64,1], index: 7, kind: input, shape index: {}]
  %s8 = inlined_call_operand.<no memory space> [shape: f32[1,1], index: 8, kind: input, shape index: {}]
  %s9 = inlined_call_operand.hbm [shape: f32[1,512], index: 9, kind: output, shape index: {}]
  %s10 = sld [smem:[#allocation0]]
  $region69: #{tpu_custom_call.1} parent=0
    _
  %s12 = ssub.s32 1, %s10
  %s13 = scalar_select 0, %s12, %s10
  %v14 = vstv %s8
  %15 = vst [vmem:[#allocation2] sm:$0x1] %v14
  $region1: #{tpu_custom_call.1} parent=0
    #allocation3 [shape = 'u8[2048]{0}', space=vmem, size = 0x800, scoped, tag = 'output window, operand 0']
    #allocation4 [shape = 's32[2]{0}', space=sflag, size = 0x8, scoped, tag = 'scoped memory for tpu_custom_call.1']
    %16 = vsyncpa [#allocation4], 0
    %s17 = scalar_lea.sflag [#allocation4], 1
    %18 = vsyncpa %s17, 0
    loop: start=0, step=1, limit=4
    $region2: #{tpu_custom_call.1} parent=1 // loop_pre_header
      _
    $region3: #{tpu_custom_call.1} parent=1 // loop_header
      %s20 = sphi 0, %s24
      %p21 = scmp.ge.s32.totalorder %s20, 4
      %s30 = sphi 0, %s32
      %s33 = sphi 0, %s30
      %s34 = sphi 0, %s33
      %s50 = sphi 0, %s34
      %s54 = sphi 0, %s54
      %s56 = sphi 0, %s54
      %s57 = sphi 0, %s56
      %s71 = sphi 0, %s57
      %s75 = sphi 0, %s75
      %s77 = sphi 0, %s75
      %s78 = sphi 0, %s77
      %s92 = sphi 0, %s78
      %s96 = sphi 0, %s96
      %s98 = sphi 0, %s96
      %s99 = sphi 0, %s98
      %s113 = sphi 0, %s99
      %s117 = sphi 0, %s117
      %s119 = sphi 0, %s117
      %s120 = sphi 0, %s119
      %s134 = sphi 0, %s120
      %s138 = sphi 0, %s138
      %s140 = sphi 0, %s138
      %s141 = sphi 0, %s140
      %s155 = sphi 0, %s141
      %s159 = sphi 0, %s159
      %s161 = sphi 0, %s159
      %s162 = sphi 0, %s161
      %s176 = sphi 0, %s162
      %s180 = sphi 0, %s180
      %s182 = sphi 0, %s180
      %s183 = sphi 0, %s182
      %s197 = sphi 0, %s183
      %s201 = sphi 0, %s201
      %s203 = sphi 0, %s201
      %s204 = sphi 0, %s203
      %s218 = sphi 0, %s204
      %s224 = sphi 0, %s226
      %s227 = sphi 0, %s224
      %s228 = sphi 0, %s227
      %s244 = sphi 0, %s228
    $region4: #{tpu_custom_call.1} parent=1 // loop_header_branch
      %23 = sbr.rel (%p21) target = $region8
    $region5: #{tpu_custom_call.1} parent=1 // loop_body
      %s25 = ssub.s32 %s20, 1
      %s26 = ssub.s32 %s20, 2
      %s27 = sadd.s32 %s20, 1
      %s28 = ssub.s32 %s20, %s27
      %p29 = scmp.eq.s32.totalorder %s28, 0
      %s31 = sadd.s32 %s30, 1
      %s32 = scalar_select %p29, %s30, %s31
      %p35 = pneg %p29
      %p36 = scmp.eq.s32.totalorder %s20, 1
      %p37 = por %p35, %p36
      %p38 = scmp.ne.s32.totalorder %s30, %s33
      %p39 = scmp.eq.s32.totalorder %s20, 0
      %p40 = por %p38, %p39
      %p41 = scmp.ne.s32.totalorder %s30, %s33
      %p42 = scmp.eq.s32.totalorder %s25, 1
      %p43 = por %p41, %p42
      %p44 = scmp.ne.s32.totalorder %s33, %s34
      %p45 = scmp.eq.s32.totalorder %s25, 0
      %p46 = por %p44, %p45
      %p47 = scmp.ne.s32.totalorder %s33, %s34
      %p48 = scmp.eq.s32.totalorder %s26, 1
      %p49 = por %p47, %p48
      %p51 = scmp.ne.s32.totalorder %s34, %s50
      %p52 = scmp.eq.s32.totalorder %s26, 0
      %p53 = por %p51, %p52
      %s55 = sadd.s32 %s54, 1
      %p58 = scmp.eq.s32.totalorder %s20, 1
      %p59 = scmp.ne.s32.totalorder %s54, %s56
      %p60 = scmp.eq.s32.totalorder %s20, 0
      %p61 = por %p59, %p60
      %p62 = scmp.ne.s32.totalorder %s54, %s56
      %p63 = scmp.eq.s32.totalorder %s25, 1
      %p64 = por %p62, %p63
      %p65 = scmp.ne.s32.totalorder %s56, %s57
      %p66 = scmp.eq.s32.totalorder %s25, 0
      %p67 = por %p65, %p66
      %p68 = scmp.ne.s32.totalorder %s56, %s57
      %p69 = scmp.eq.s32.totalorder %s26, 1
      %p70 = por %p68, %p69
      %p72 = scmp.ne.s32.totalorder %s57, %s71
      %p73 = scmp.eq.s32.totalorder %s26, 0
      %p74 = por %p72, %p73
      %s76 = sadd.s32 %s75, 1
      %p79 = scmp.eq.s32.totalorder %s20, 1
      %p80 = scmp.ne.s32.totalorder %s75, %s77
      %p81 = scmp.eq.s32.totalorder %s20, 0
      %p82 = por %p80, %p81
      %p83 = scmp.ne.s32.totalorder %s75, %s77
      %p84 = scmp.eq.s32.totalorder %s25, 1
      %p85 = por %p83, %p84
      %p86 = scmp.ne.s32.totalorder %s77, %s78
      %p87 = scmp.eq.s32.totalorder %s25, 0
      %p88 = por %p86, %p87
      %p89 = scmp.ne.s32.totalorder %s77, %s78
      %p90 = scmp.eq.s32.totalorder %s26, 1
      %p91 = por %p89, %p90
      %p93 = scmp.ne.s32.totalorder %s78, %s92
      %p94 = scmp.eq.s32.totalorder %s26, 0
      %p95 = por %p93, %p94
      %s97 = sadd.s32 %s96, 1
      %p100 = scmp.eq.s32.totalorder %s20, 1
      %p101 = scmp.ne.s32.totalorder %s96, %s98
      %p102 = scmp.eq.s32.totalorder %s20, 0
      %p103 = por %p101, %p102
      %p104 = scmp.ne.s32.totalorder %s96, %s98
      %p105 = scmp.eq.s32.totalorder %s25, 1
      %p106 = por %p104, %p105
      %p107 = scmp.ne.s32.totalorder %s98, %s99
      %p108 = scmp.eq.s32.totalorder %s25, 0
      %p109 = por %p107, %p108
      %p110 = scmp.ne.s32.totalorder %s98, %s99
      %p111 = scmp.eq.s32.totalorder %s26, 1
      %p112 = por %p110, %p111
      %p114 = scmp.ne.s32.totalorder %s99, %s113
      %p115 = scmp.eq.s32.totalorder %s26, 0
      %p116 = por %p114, %p115
      %s118 = sadd.s32 %s117, 1
      %p121 = scmp.eq.s32.totalorder %s20, 1
      %p122 = scmp.ne.s32.totalorder %s117, %s119
      %p123 = scmp.eq.s32.totalorder %s20, 0
      %p124 = por %p122, %p123
      %p125 = scmp.ne.s32.totalorder %s117, %s119
      %p126 = scmp.eq.s32.totalorder %s25, 1
      %p127 = por %p125, %p126
      %p128 = scmp.ne.s32.totalorder %s119, %s120
      %p129 = scmp.eq.s32.totalorder %s25, 0
      %p130 = por %p128, %p129
      %p131 = scmp.ne.s32.totalorder %s119, %s120
      %p132 = scmp.eq.s32.totalorder %s26, 1
      %p133 = por %p131, %p132
      %p135 = scmp.ne.s32.totalorder %s120, %s134
      %p136 = scmp.eq.s32.totalorder %s26, 0
      %p137 = por %p135, %p136
      %s139 = sadd.s32 %s138, 1
      %p142 = scmp.eq.s32.totalorder %s20, 1
      %p143 = scmp.ne.s32.totalorder %s138, %s140
      %p144 = scmp.eq.s32.totalorder %s20, 0
      %p145 = por %p143, %p144
      %p146 = scmp.ne.s32.totalorder %s138, %s140
      %p147 = scmp.eq.s32.totalorder %s25, 1
      %p148 = por %p146, %p147
      %p149 = scmp.ne.s32.totalorder %s140, %s141
      %p150 = scmp.eq.s32.totalorder %s25, 0
      %p151 = por %p149, %p150
      %p152 = scmp.ne.s32.totalorder %s140, %s141
      %p153 = scmp.eq.s32.totalorder %s26, 1
      %p154 = por %p152, %p153
      %p156 = scmp.ne.s32.totalorder %s141, %s155
      %p157 = scmp.eq.s32.totalorder %s26, 0
      %p158 = por %p156, %p157
      %s160 = sadd.s32 %s159, 1
      %p163 = scmp.eq.s32.totalorder %s20, 1
      %p164 = scmp.ne.s32.totalorder %s159, %s161
      %p165 = scmp.eq.s32.totalorder %s20, 0
      %p166 = por %p164, %p165
      %p167 = scmp.ne.s32.totalorder %s159, %s161
      %p168 = scmp.eq.s32.totalorder %s25, 1
      %p169 = por %p167, %p168
      %p170 = scmp.ne.s32.totalorder %s161, %s162
      %p171 = scmp.eq.s32.totalorder %s25, 0
      %p172 = por %p170, %p171
      %p173 = scmp.ne.s32.totalorder %s161, %s162
      %p174 = scmp.eq.s32.totalorder %s26, 1
      %p175 = por %p173, %p174
      %p177 = scmp.ne.s32.totalorder %s162, %s176
      %p178 = scmp.eq.s32.totalorder %s26, 0
      %p179 = por %p177, %p178
      %s181 = sadd.s32 %s180, 1
      %p184 = scmp.eq.s32.totalorder %s20, 1
      %p185 = scmp.ne.s32.totalorder %s180, %s182
      %p186 = scmp.eq.s32.totalorder %s20, 0
      %p187 = por %p185, %p186
      %p188 = scmp.ne.s32.totalorder %s180, %s182
      %p189 = scmp.eq.s32.totalorder %s25, 1
      %p190 = por %p188, %p189
      %p191 = scmp.ne.s32.totalorder %s182, %s183
      %p192 = scmp.eq.s32.totalorder %s25, 0
      %p193 = por %p191, %p192
      %p194 = scmp.ne.s32.totalorder %s182, %s183
      %p195 = scmp.eq.s32.totalorder %s26, 1
      %p196 = por %p194, %p195
      %p198 = scmp.ne.s32.totalorder %s183, %s197
      %p199 = scmp.eq.s32.totalorder %s26, 0
      %p200 = por %p198, %p199
      %s202 = sadd.s32 %s201, 1
      %p205 = scmp.eq.s32.totalorder %s20, 1
      %p206 = scmp.ne.s32.totalorder %s201, %s203
      %p207 = scmp.eq.s32.totalorder %s20, 0
      %p208 = por %p206, %p207
      %p209 = scmp.ne.s32.totalorder %s201, %s203
      %p210 = scmp.eq.s32.totalorder %s25, 1
      %p211 = por %p209, %p210
      %p212 = scmp.ne.s32.totalorder %s203, %s204
      %p213 = scmp.eq.s32.totalorder %s25, 0
      %p214 = por %p212, %p213
      %p215 = scmp.ne.s32.totalorder %s203, %s204
      %p216 = scmp.eq.s32.totalorder %s26, 1
      %p217 = por %p215, %p216
      %p219 = scmp.ne.s32.totalorder %s204, %s218
      %p220 = scmp.eq.s32.totalorder %s26, 0
      %p221 = por %p219, %p220
      %s222 = ssub.s32 %s20, %s27
      %p223 = scmp.eq.s32.totalorder %s222, 0
      %s225 = sadd.s32 %s224, 1
      %s226 = scalar_select %p223, %s224, %s225
      %p229 = pneg %p223
      %p230 = scmp.eq.s32.totalorder %s20, 1
      %p231 = por %p229, %p230
      %p232 = scmp.ne.s32.totalorder %s224, %s227
      %p233 = scmp.eq.s32.totalorder %s20, 0
      %p234 = por %p232, %p233
      %p235 = scmp.ne.s32.totalorder %s224, %s227
      %p236 = scmp.eq.s32.totalorder %s25, 1
      %p237 = por %p235, %p236
      %p238 = scmp.ne.s32.totalorder %s227, %s228
      %p239 = scmp.eq.s32.totalorder %s25, 0
      %p240 = por %p238, %p239
      %p241 = scmp.ne.s32.totalorder %s227, %s228
      %p242 = scmp.eq.s32.totalorder %s26, 1
      %p243 = por %p241, %p242
      %p245 = scmp.ne.s32.totalorder %s228, %s244
      %p246 = scmp.eq.s32.totalorder %s26, 0
      %p247 = por %p245, %p246
      %p248 = scmp.le.s32.totalorder 1, %s20
      %p249 = scmp.lt.s32.totalorder %s20, 3
      %p250 = pnand %p248, %p249
      %p251 = pneg %p250
      // Predicated region
      $region9: #{tpu_custom_call.1} parent=5 // pred_check
        _
      $region10: #{tpu_custom_call.1} parent=5 // pred_check_branch
        %253 = sbr.rel (%p250) target = $region12
      $region11: #{tpu_custom_call.1} parent=5 // pred_region
        %s254 = ssub.s32 %s20, 1
        // Predicated region
        $region13: #{tpu_custom_call.1} parent=11 // pred_check
          %p255 = pneg %p67
        $region14: #{tpu_custom_call.1} parent=11 // pred_check_branch
          %257 = sbr.rel (%p255) target = $region16
        $region15: #{tpu_custom_call.1} parent=11 // pred_region
          _
        $region16: #{tpu_custom_call.1} parent=11 // pred_fallthru
          _
        // Predicated region
        $region17: #{tpu_custom_call.1} parent=11 // pred_check
          %p258 = pneg %p88
        $region18: #{tpu_custom_call.1} parent=11 // pred_check_branch
          %260 = sbr.rel (%p258) target = $region20
        $region19: #{tpu_custom_call.1} parent=11 // pred_region
          _
        $region20: #{tpu_custom_call.1} parent=11 // pred_fallthru
          _
        // Predicated region
        $region21: #{tpu_custom_call.1} parent=11 // pred_check
          %p261 = pneg %p109
        $region22: #{tpu_custom_call.1} parent=11 // pred_check_branch
          %263 = sbr.rel (%p261) target = $region24
        $region23: #{tpu_custom_call.1} parent=11 // pred_region
          _
        $region24: #{tpu_custom_call.1} parent=11 // pred_fallthru
          _
        // Predicated region
        $region25: #{tpu_custom_call.1} parent=11 // pred_check
          %p264 = pneg %p130
        $region26: #{tpu_custom_call.1} parent=11 // pred_check_branch
          %266 = sbr.rel (%p264) target = $region28
        $region27: #{tpu_custom_call.1} parent=11 // pred_region
          _
        $region28: #{tpu_custom_call.1} parent=11 // pred_fallthru
          _
        // Predicated region
        $region29: #{tpu_custom_call.1} parent=11 // pred_check
          %p267 = pneg %p151
        $region30: #{tpu_custom_call.1} parent=11 // pred_check_branch
          %269 = sbr.rel (%p267) target = $region32
        $region31: #{tpu_custom_call.1} parent=11 // pred_region
          _
        $region32: #{tpu_custom_call.1} parent=11 // pred_fallthru
          _
        // Predicated region
        $region33: #{tpu_custom_call.1} parent=11 // pred_check
          %p270 = pneg %p172
        $region34: #{tpu_custom_call.1} parent=11 // pred_check_branch
          %272 = sbr.rel (%p270) target = $region36
        $region35: #{tpu_custom_call.1} parent=11 // pred_region
          _
        $region36: #{tpu_custom_call.1} parent=11 // pred_fallthru
          _
        // Predicated region
        $region37: #{tpu_custom_call.1} parent=11 // pred_check
          %p273 = pneg %p193
        $region38: #{tpu_custom_call.1} parent=11 // pred_check_branch
          %275 = sbr.rel (%p273) target = $region40
        $region39: #{tpu_custom_call.1} parent=11 // pred_region
          _
        $region40: #{tpu_custom_call.1} parent=11 // pred_fallthru
          _
        // Predicated region
        $region41: #{tpu_custom_call.1} parent=11 // pred_check
          %p276 = pneg %p214
        $region42: #{tpu_custom_call.1} parent=11 // pred_check_branch
          %278 = sbr.rel (%p276) target = $region44
        $region43: #{tpu_custom_call.1} parent=11 // pred_region
          _
        $region44: #{tpu_custom_call.1} parent=11 // pred_fallthru
          _
      $region12: #{tpu_custom_call.1} parent=5 // pred_fallthru
        _
      %p279 = scmp.lt.s32.totalorder %s20, 2
      // Predicated region
      $region45: #{tpu_custom_call.1} parent=5 // pred_check
        %p280 = pneg %p279
      $region46: #{tpu_custom_call.1} parent=5 // pred_check_branch
        %282 = sbr.rel (%p280) target = $region48
      $region47: #{tpu_custom_call.1} parent=5 // pred_region
        // Predicated region
        $region49: #{tpu_custom_call.1} parent=47 // pred_check
          %p283 = pneg %p40
        $region50: #{tpu_custom_call.1} parent=47 // pred_check_branch
          %285 = sbr.rel (%p283) target = $region52
        $region51: #{tpu_custom_call.1} parent=47 // pred_region
          %s286 = smul.u32 2, %s20
          %p287 = scmp.lt.s32.totalorder %s286, 3
          %s288 = scalar_select %p287, %s286, 3
          %s289 = scalar_lea.vmem %s0, %s288
          %s290 = smul.u32 2, %s20
        $region52: #{tpu_custom_call.1} parent=47 // pred_fallthru
          _
      $region48: #{tpu_custom_call.1} parent=5 // pred_fallthru
        _
      %p291 = scmp.le.s32.totalorder 1, %s20
      %p292 = scmp.lt.s32.totalorder %s20, 3
      %p293 = pnand %p291, %p292
      %p294 = pneg %p293
      // Predicated region
      $region53: #{tpu_custom_call.1} parent=5 // pred_check
        _
      $region54: #{tpu_custom_call.1} parent=5 // pred_check_branch
        %296 = sbr.rel (%p293) target = $region56
      $region55: #{tpu_custom_call.1} parent=5 // pred_region
        %s297 = ssub.s32 %s20, 1
        %s298 = smul.u32 2, %s25
        %p299 = scmp.lt.s32.totalorder %s298, 3
        %s300 = scalar_select %p299, %s298, 3
        %s301 = scalar_lea.vmem %s0, %s300
        %p302 = pneg %p46
        %p303 = pneg %p43
        %p304 = pneg %p67
        %p305 = pneg %p64
        %p306 = pneg %p88
        %p307 = pneg %p85
        %p308 = pneg %p109
        %p309 = pneg %p106
        %p310 = pneg %p130
        %p311 = pneg %p127
        %p312 = pneg %p151
        %p313 = pneg %p148
        %p314 = pneg %p172
        %p315 = pneg %p169
        %p316 = pneg %p193
        %p317 = pneg %p190
        %p318 = pneg %p214
        %p319 = pneg %p211
        %p320 = pneg %p240
        %p321 = pneg %p237
        %s322 = sand.u32 %s227, 1
        %s323 = scalar_lea.sflag [#allocation4], %s322
        %s324 = sand.u32 %s227, 1
        %s325 = smul.addr %s324, 2
        %s326 = scalar_lea.vmem [#allocation3], %s325
        %s327 = smul.u32 2, %s25
        %p328 = scmp.lt.s32.totalorder %s327, 3
        %s329 = scalar_select %p328, %s327, 3
        %s330 = scalar_lea.vmem %s0, %s329
        %s331 = smul.u32 2, %s25
        %s332 = smul.u32 2, %s25
        %v333 = vld [vmem:[%s330] sm:$0x3]
        %v334 = vld [vmem:[%s1] sm:$0xff]
        %v335 = vld [vmem:[%s1 + $0x8] sm:$0xff]
        %v336 = vld [vmem:[%s1 + $0x10] sm:$0xff]
        %v337 = vld [vmem:[%s1 + $0x18] sm:$0xff]
        %v338 = vld [vmem:[%s1 + $0x20] sm:$0xff]
        %v339 = vld [vmem:[%s1 + $0x28] sm:$0xff]
        %v340 = vld [vmem:[%s1 + $0x30] sm:$0xff]
        %v341 = vld [vmem:[%s1 + $0x38] sm:$0xff]
        %v342 = vld [vmem:[%s1 + $0x40] sm:$0xff]
        %v343 = vld [vmem:[%s1 + $0x48] sm:$0xff]
        %v344 = vld [vmem:[%s1 + $0x50] sm:$0xff]
        %v345 = vld [vmem:[%s1 + $0x58] sm:$0xff]
        %v346 = vld [vmem:[%s1 + $0x60] sm:$0xff]
        %v347 = vld [vmem:[%s1 + $0x68] sm:$0xff]
        %v348 = vld [vmem:[%s1 + $0x70] sm:$0xff]
        %v349 = vld [vmem:[%s1 + $0x78] sm:$0xff]
        %351 = vset.pattern.permute.xlu0 0
        %352 = vperm.xlu0 %351, %v334
        %v353 = vpop.permute.xlu0 %352
        %356 = vset.pattern.permute.xlu0 0
        %357 = vperm.xlu0 %356, %v335
        %v358 = vpop.permute.xlu0 %357
        %361 = vset.pattern.permute.xlu0 0
        %362 = vperm.xlu0 %361, %v336
        %v363 = vpop.permute.xlu0 %362
        %366 = vset.pattern.permute.xlu0 0
        %367 = vperm.xlu0 %366, %v337
        %v368 = vpop.permute.xlu0 %367
        %371 = vset.pattern.permute.xlu0 0
        %372 = vperm.xlu0 %371, %v338
        %v373 = vpop.permute.xlu0 %372
        %376 = vset.pattern.permute.xlu0 0
        %377 = vperm.xlu0 %376, %v339
        %v378 = vpop.permute.xlu0 %377
        %381 = vset.pattern.permute.xlu0 0
        %382 = vperm.xlu0 %381, %v340
        %v383 = vpop.permute.xlu0 %382
        %386 = vset.pattern.permute.xlu0 0
        %387 = vperm.xlu0 %386, %v341
        %v388 = vpop.permute.xlu0 %387
        %391 = vset.pattern.permute.xlu0 0
        %392 = vperm.xlu0 %391, %v342
        %v393 = vpop.permute.xlu0 %392
        %396 = vset.pattern.permute.xlu0 0
        %397 = vperm.xlu0 %396, %v343
        %v398 = vpop.permute.xlu0 %397
        %401 = vset.pattern.permute.xlu0 0
        %402 = vperm.xlu0 %401, %v344
        %v403 = vpop.permute.xlu0 %402
        %406 = vset.pattern.permute.xlu0 0
        %407 = vperm.xlu0 %406, %v345
        %v408 = vpop.permute.xlu0 %407
        %411 = vset.pattern.permute.xlu0 0
        %412 = vperm.xlu0 %411, %v346
        %v413 = vpop.permute.xlu0 %412
        %416 = vset.pattern.permute.xlu0 0
        %417 = vperm.xlu0 %416, %v347
        %v418 = vpop.permute.xlu0 %417
        %421 = vset.pattern.permute.xlu0 0
        %422 = vperm.xlu0 %421, %v348
        %v423 = vpop.permute.xlu0 %422
        %426 = vset.pattern.permute.xlu0 0
        %427 = vperm.xlu0 %426, %v349
        %v428 = vpop.permute.xlu0 %427
        %v431 = vlaneseq
        %v432 = vshrl.u32 %v431, 7
        %v433 = vsub.s32 0, %v432
        %v434 = vrot.slane %v333, %v433
        %v435 = vlaneseq
        %v436 = vshrl.u32 %v435, 7
        %v437 = vsub.s32 1, %v436
        %v438 = vrot.slane %v333, %v437
        %v441 = vmul.f32 %v353, %v434
        %v442 = vmul.f32 %v353, %v438
        %v443 = vmul.f32 %v358, %v434
        %v444 = vmul.f32 %v358, %v438
        %v445 = vmul.f32 %v363, %v434
        %v446 = vmul.f32 %v363, %v438
        %v447 = vmul.f32 %v368, %v434
        %v448 = vmul.f32 %v368, %v438
        %v449 = vmul.f32 %v373, %v434
        %v450 = vmul.f32 %v373, %v438
        %v451 = vmul.f32 %v378, %v434
        %v452 = vmul.f32 %v378, %v438
        %v453 = vmul.f32 %v383, %v434
        %v454 = vmul.f32 %v383, %v438
        %v455 = vmul.f32 %v388, %v434
        %v456 = vmul.f32 %v388, %v438
        %v457 = vmul.f32 %v393, %v434
        %v458 = vmul.f32 %v393, %v438
        %v459 = vmul.f32 %v398, %v434
        %v460 = vmul.f32 %v398, %v438
        %v461 = vmul.f32 %v403, %v434
        %v462 = vmul.f32 %v403, %v438
        %v463 = vmul.f32 %v408, %v434
        %v464 = vmul.f32 %v408, %v438
        %v465 = vmul.f32 %v413, %v434
        %v466 = vmul.f32 %v413, %v438
        %v467 = vmul.f32 %v418, %v434
        %v468 = vmul.f32 %v418, %v438
        %v469 = vmul.f32 %v423, %v434
        %v470 = vmul.f32 %v423, %v438
        %v471 = vmul.f32 %v428, %v434
        %v472 = vmul.f32 %v428, %v438
        %v473 = vld [vmem:[%s2] sm:$0xff]
        %v474 = vld [vmem:[%s2 + $0x8] sm:$0xff]
        %v475 = vld [vmem:[%s2 + $0x10] sm:$0xff]
        %v476 = vld [vmem:[%s2 + $0x18] sm:$0xff]
        %v477 = vld [vmem:[%s2 + $0x20] sm:$0xff]
        %v478 = vld [vmem:[%s2 + $0x28] sm:$0xff]
        %v479 = vld [vmem:[%s2 + $0x30] sm:$0xff]
        %v480 = vld [vmem:[%s2 + $0x38] sm:$0xff]
        %v481 = vld [vmem:[%s2 + $0x40] sm:$0xff]
        %v482 = vld [vmem:[%s2 + $0x48] sm:$0xff]
        %v483 = vld [vmem:[%s2 + $0x50] sm:$0xff]
        %v484 = vld [vmem:[%s2 + $0x58] sm:$0xff]
        %v485 = vld [vmem:[%s2 + $0x60] sm:$0xff]
        %v486 = vld [vmem:[%s2 + $0x68] sm:$0xff]
        %v487 = vld [vmem:[%s2 + $0x70] sm:$0xff]
        %v488 = vld [vmem:[%s2 + $0x78] sm:$0xff]
        %490 = vset.pattern.permute.xlu0 0
        %491 = vperm.xlu0 %490, %v473
        %v492 = vpop.permute.xlu0 %491
        %495 = vset.pattern.permute.xlu0 0
        %496 = vperm.xlu0 %495, %v474
        %v497 = vpop.permute.xlu0 %496
        %500 = vset.pattern.permute.xlu0 0
        %501 = vperm.xlu0 %500, %v475
        %v502 = vpop.permute.xlu0 %501
        %505 = vset.pattern.permute.xlu0 0
        %506 = vperm.xlu0 %505, %v476
        %v507 = vpop.permute.xlu0 %506
        %510 = vset.pattern.permute.xlu0 0
        %511 = vperm.xlu0 %510, %v477
        %v512 = vpop.permute.xlu0 %511
        %515 = vset.pattern.permute.xlu0 0
        %516 = vperm.xlu0 %515, %v478
        %v517 = vpop.permute.xlu0 %516
        %520 = vset.pattern.permute.xlu0 0
        %521 = vperm.xlu0 %520, %v479
        %v522 = vpop.permute.xlu0 %521
        %525 = vset.pattern.permute.xlu0 0
        %526 = vperm.xlu0 %525, %v480
        %v527 = vpop.permute.xlu0 %526
        %530 = vset.pattern.permute.xlu0 0
        %531 = vperm.xlu0 %530, %v481
        %v532 = vpop.permute.xlu0 %531
        %535 = vset.pattern.permute.xlu0 0
        %536 = vperm.xlu0 %535, %v482
        %v537 = vpop.permute.xlu0 %536
        %540 = vset.pattern.permute.xlu0 0
        %541 = vperm.xlu0 %540, %v483
        %v542 = vpop.permute.xlu0 %541
        %545 = vset.pattern.permute.xlu0 0
        %546 = vperm.xlu0 %545, %v484
        %v547 = vpop.permute.xlu0 %546
        %550 = vset.pattern.permute.xlu0 0
        %551 = vperm.xlu0 %550, %v485
        %v552 = vpop.permute.xlu0 %551
        %555 = vset.pattern.permute.xlu0 0
        %556 = vperm.xlu0 %555, %v486
        %v557 = vpop.permute.xlu0 %556
        %560 = vset.pattern.permute.xlu0 0
        %561 = vperm.xlu0 %560, %v487
        %v562 = vpop.permute.xlu0 %561
        %565 = vset.pattern.permute.xlu0 0
        %566 = vperm.xlu0 %565, %v488
        %v567 = vpop.permute.xlu0 %566
        %v569 = vadd.f32 %v441, %v492
        %v570 = vadd.f32 %v442, %v492
        %v571 = vadd.f32 %v443, %v497
        %v572 = vadd.f32 %v444, %v497
        %v573 = vadd.f32 %v445, %v502
        %v574 = vadd.f32 %v446, %v502
        %v575 = vadd.f32 %v447, %v507
        %v576 = vadd.f32 %v448, %v507
        %v577 = vadd.f32 %v449, %v512
        %v578 = vadd.f32 %v450, %v512
        %v579 = vadd.f32 %v451, %v517
        %v580 = vadd.f32 %v452, %v517
        %v581 = vadd.f32 %v453, %v522
        %v582 = vadd.f32 %v454, %v522
        %v583 = vadd.f32 %v455, %v527
        %v584 = vadd.f32 %v456, %v527
        %v585 = vadd.f32 %v457, %v532
        %v586 = vadd.f32 %v458, %v532
        %v587 = vadd.f32 %v459, %v537
        %v588 = vadd.f32 %v460, %v537
        %v589 = vadd.f32 %v461, %v542
        %v590 = vadd.f32 %v462, %v542
        %v591 = vadd.f32 %v463, %v547
        %v592 = vadd.f32 %v464, %v547
        %v593 = vadd.f32 %v465, %v552
        %v594 = vadd.f32 %v466, %v552
        %v595 = vadd.f32 %v467, %v557
        %v596 = vadd.f32 %v468, %v557
        %v597 = vadd.f32 %v469, %v562
        %v598 = vadd.f32 %v470, %v562
        %v599 = vadd.f32 %v471, %v567
        %v600 = vadd.f32 %v472, %v567
        %v601 = vmax.f32 %v569, 0.0
        %v602 = vmax.f32 %v570, 0.0
        %v603 = vmax.f32 %v571, 0.0
        %v604 = vmax.f32 %v572, 0.0
        %v605 = vmax.f32 %v573, 0.0
        %v606 = vmax.f32 %v574, 0.0
        %v607 = vmax.f32 %v575, 0.0
        %v608 = vmax.f32 %v576, 0.0
        %v609 = vmax.f32 %v577, 0.0
        %v610 = vmax.f32 %v578, 0.0
        %v611 = vmax.f32 %v579, 0.0
        %v612 = vmax.f32 %v580, 0.0
        %v613 = vmax.f32 %v581, 0.0
        %v614 = vmax.f32 %v582, 0.0
        %v615 = vmax.f32 %v583, 0.0
        %v616 = vmax.f32 %v584, 0.0
        %v617 = vmax.f32 %v585, 0.0
        %v618 = vmax.f32 %v586, 0.0
        %v619 = vmax.f32 %v587, 0.0
        %v620 = vmax.f32 %v588, 0.0
        %v621 = vmax.f32 %v589, 0.0
        %v622 = vmax.f32 %v590, 0.0
        %v623 = vmax.f32 %v591, 0.0
        %v624 = vmax.f32 %v592, 0.0
        %v625 = vmax.f32 %v593, 0.0
        %v626 = vmax.f32 %v594, 0.0
        %v627 = vmax.f32 %v595, 0.0
        %v628 = vmax.f32 %v596, 0.0
        %v629 = vmax.f32 %v597, 0.0
        %v630 = vmax.f32 %v598, 0.0
        %v631 = vmax.f32 %v599, 0.0
        %v632 = vmax.f32 %v600, 0.0
        %v633 = vld [vmem:[%s3] sm:$0xff]
        %v634 = vld [vmem:[%s3 + $0x8] sm:$0xff]
        %v635 = vld [vmem:[%s3 + $0x10] sm:$0xff]
        %v636 = vld [vmem:[%s3 + $0x18] sm:$0xff]
        %v637 = vld [vmem:[%s3 + $0x20] sm:$0xff]
        %v638 = vld [vmem:[%s3 + $0x28] sm:$0xff]
        %v639 = vld [vmem:[%s3 + $0x30] sm:$0xff]
        %v640 = vld [vmem:[%s3 + $0x38] sm:$0xff]
        %v641 = vld [vmem:[%s3 + $0x40] sm:$0xff]
        %v642 = vld [vmem:[%s3 + $0x48] sm:$0xff]
        %v643 = vld [vmem:[%s3 + $0x50] sm:$0xff]
        %v644 = vld [vmem:[%s3 + $0x58] sm:$0xff]
        %v645 = vld [vmem:[%s3 + $0x60] sm:$0xff]
        %v646 = vld [vmem:[%s3 + $0x68] sm:$0xff]
        %v647 = vld [vmem:[%s3 + $0x70] sm:$0xff]
        %v648 = vld [vmem:[%s3 + $0x78] sm:$0xff]
        %v649 = vld [vmem:[%s4] sm:$0xff]
        %v650 = vld [vmem:[%s4 + $0x8] sm:$0xff]
        %v651 = vld [vmem:[%s4 + $0x10] sm:$0xff]
        %v652 = vld [vmem:[%s4 + $0x18] sm:$0xff]
        %v653 = vld [vmem:[%s4 + $0x20] sm:$0xff]
        %v654 = vld [vmem:[%s4 + $0x28] sm:$0xff]
        %v655 = vld [vmem:[%s4 + $0x30] sm:$0xff]
        %v656 = vld [vmem:[%s4 + $0x38] sm:$0xff]
        %v657 = vld [vmem:[%s4 + $0x40] sm:$0xff]
        %v658 = vld [vmem:[%s4 + $0x48] sm:$0xff]
        %v659 = vld [vmem:[%s4 + $0x50] sm:$0xff]
        %v660 = vld [vmem:[%s4 + $0x58] sm:$0xff]
        %v661 = vld [vmem:[%s4 + $0x60] sm:$0xff]
        %v662 = vld [vmem:[%s4 + $0x68] sm:$0xff]
        %v663 = vld [vmem:[%s4 + $0x70] sm:$0xff]
        %v664 = vld [vmem:[%s4 + $0x78] sm:$0xff]
        %666 = vset.pattern.permute.xlu0 0
        %667 = vperm.xlu0 %666, %v649
        %v668 = vpop.permute.xlu0 %667
        %671 = vset.pattern.permute.xlu0 0
        %672 = vperm.xlu0 %671, %v650
        %v673 = vpop.permute.xlu0 %672
        %676 = vset.pattern.permute.xlu0 0
        %677 = vperm.xlu0 %676, %v651
        %v678 = vpop.permute.xlu0 %677
        %681 = vset.pattern.permute.xlu0 0
        %682 = vperm.xlu0 %681, %v652
        %v683 = vpop.permute.xlu0 %682
        %686 = vset.pattern.permute.xlu0 0
        %687 = vperm.xlu0 %686, %v653
        %v688 = vpop.permute.xlu0 %687
        %691 = vset.pattern.permute.xlu0 0
        %692 = vperm.xlu0 %691, %v654
        %v693 = vpop.permute.xlu0 %692
        %696 = vset.pattern.permute.xlu0 0
        %697 = vperm.xlu0 %696, %v655
        %v698 = vpop.permute.xlu0 %697
        %701 = vset.pattern.permute.xlu0 0
        %702 = vperm.xlu0 %701, %v656
        %v703 = vpop.permute.xlu0 %702
        %706 = vset.pattern.permute.xlu0 0
        %707 = vperm.xlu0 %706, %v657
        %v708 = vpop.permute.xlu0 %707
        %711 = vset.pattern.permute.xlu0 0
        %712 = vperm.xlu0 %711, %v658
        %v713 = vpop.permute.xlu0 %712
        %716 = vset.pattern.permute.xlu0 0
        %717 = vperm.xlu0 %716, %v659
        %v718 = vpop.permute.xlu0 %717
        %721 = vset.pattern.permute.xlu0 0
        %722 = vperm.xlu0 %721, %v660
        %v723 = vpop.permute.xlu0 %722
        %726 = vset.pattern.permute.xlu0 0
        %727 = vperm.xlu0 %726, %v661
        %v728 = vpop.permute.xlu0 %727
        %731 = vset.pattern.permute.xlu0 0
        %732 = vperm.xlu0 %731, %v662
        %v733 = vpop.permute.xlu0 %732
        %736 = vset.pattern.permute.xlu0 0
        %737 = vperm.xlu0 %736, %v663
        %v738 = vpop.permute.xlu0 %737
        %741 = vset.pattern.permute.xlu0 0
        %742 = vperm.xlu0 %741, %v664
        %v743 = vpop.permute.xlu0 %742
        %745 = vmatprep.subr.mxu0 %v602
        %746 = vmatpush1.msra.mxu0 %v601
        %747 = vmatprep.subr.mxu0 %v604
        %748 = vmatpush1.msra.mxu0 %v603
        %749 = vmatprep.subr.mxu0 %v606
        %750 = vmatpush1.msra.mxu0 %v605
        %751 = vmatprep.subr.mxu0 %v608
        %752 = vmatpush1.msra.mxu0 %v607
        %753 = vmatprep.subr.mxu0 %v610
        %754 = vmatpush1.msra.mxu0 %v609
        %755 = vmatprep.subr.mxu0 %v612
        %756 = vmatpush1.msra.mxu0 %v611
        %757 = vmatprep.subr.mxu0 %v614
        %758 = vmatpush1.msra.mxu0 %v613
        %759 = vmatprep.subr.mxu0 %v616
        %760 = vmatpush1.msra.mxu0 %v615
        %761 = vmatprep.subr.mxu0 %v618
        %762 = vmatpush1.msra.mxu0 %v617
        %763 = vmatprep.subr.mxu0 %v620
        %764 = vmatpush1.msra.mxu0 %v619
        %765 = vmatprep.subr.mxu0 %v622
        %766 = vmatpush1.msra.mxu0 %v621
        %767 = vmatprep.subr.mxu0 %v624
        %768 = vmatpush1.msra.mxu0 %v623
        %769 = vmatprep.subr.mxu0 %v626
        %770 = vmatpush1.msra.mxu0 %v625
        %771 = vmatprep.subr.mxu0 %v628
        %772 = vmatpush1.msra.mxu0 %v627
        %773 = vmatprep.subr.mxu0 %v630
        %774 = vmatpush1.msra.mxu0 %v629
        %775 = vmatprep.subr.mxu0 %v632
        %776 = vmatpush1.msra.mxu0 %v631
        %777 = vmatprep.subr.mxu0 0.0
        %778 = vmatpush1.msra.mxu0 0.0
        %779 = vmatprep.subr.mxu0 0.0
        %780 = vmatpush1.msra.mxu0 0.0
        %781 = vmatprep.subr.mxu0 0.0
        %782 = vmatpush1.msra.mxu0 0.0
        %783 = vmatprep.subr.mxu0 0.0
        %784 = vmatpush1.msra.mxu0 0.0
        %785 = vmatprep.subr.mxu0 0.0
        %786 = vmatpush1.msra.mxu0 0.0
        %787 = vmatprep.subr.mxu0 0.0
        %788 = vmatpush1.msra.mxu0 0.0
        %789 = vmatprep.subr.mxu0 0.0
        %790 = vmatpush1.msra.mxu0 0.0
        %791 = vmatprep.subr.mxu0 0.0
        %792 = vmatpush1.msra.mxu0 0.0
        %793 = vmatprep.subr.mxu0 0.0
        %794 = vmatpush1.msra.mxu0 0.0
        %795 = vmatprep.subr.mxu0 0.0
        %796 = vmatpush1.msra.mxu0 0.0
        %797 = vmatprep.subr.mxu0 0.0
        %798 = vmatpush1.msra.mxu0 0.0
        %799 = vmatprep.subr.mxu0 0.0
        %800 = vmatpush1.msra.mxu0 0.0
        %801 = vmatprep.subr.mxu0 0.0
        %802 = vmatpush1.msra.mxu0 0.0
        %803 = vmatprep.subr.mxu0 0.0
        %804 = vmatpush1.msra.mxu0 0.0
        %805 = vmatprep.subr.mxu0 0.0
        %806 = vmatpush1.msra.mxu0 0.0
        %807 = vmatprep.subr.mxu0 0.0
        %808 = vmatpush1.msra.mxu0 0.0
        %809 = vmatprep.mubr.f32.mxu0 0.0
        %810 = vmatmul.mubr.f32.gmra.mrb[0].mxu0 %v633
        %v811 = vpop.f32.mrb[0].mxu0
        %v812 = vadd.f32 %v668, %v811
        %v813 = vpop.f32.mrb[0].mxu0
        %v814 = vadd.f32 %v668, %v813
        %815 = vmatprep.mubr.f32.mxu0 0.0
        %816 = vmatmul.mubr.f32.gmra.mrb[0].mxu0 %v634
        %v817 = vpop.f32.mrb[0].mxu0
        %v818 = vadd.f32 %v673, %v817
        %v819 = vpop.f32.mrb[0].mxu0
        %v820 = vadd.f32 %v673, %v819
        %821 = vmatprep.mubr.f32.mxu0 0.0
        %822 = vmatmul.mubr.f32.gmra.mrb[0].mxu0 %v635
        %v823 = vpop.f32.mrb[0].mxu0
        %v824 = vadd.f32 %v678, %v823
        %v825 = vpop.f32.mrb[0].mxu0
        %v826 = vadd.f32 %v678, %v825
        %827 = vmatprep.mubr.f32.mxu0 0.0
        %828 = vmatmul.mubr.f32.gmra.mrb[0].mxu0 %v636
        %v829 = vpop.f32.mrb[0].mxu0
        %v830 = vadd.f32 %v683, %v829
        %v831 = vpop.f32.mrb[0].mxu0
        %v832 = vadd.f32 %v683, %v831
        %833 = vmatprep.mubr.f32.mxu0 0.0
        %834 = vmatmul.mubr.f32.gmra.mrb[0].mxu0 %v637
        %v835 = vpop.f32.mrb[0].mxu0
        %v836 = vadd.f32 %v688, %v835
        %v837 = vpop.f32.mrb[0].mxu0
        %v838 = vadd.f32 %v688, %v837
        %839 = vmatprep.mubr.f32.mxu0 0.0
        %840 = vmatmul.mubr.f32.gmra.mrb[0].mxu0 %v638
        %v841 = vpop.f32.mrb[0].mxu0
        %v842 = vadd.f32 %v693, %v841
        %v843 = vpop.f32.mrb[0].mxu0
        %v844 = vadd.f32 %v693, %v843
        %845 = vmatprep.mubr.f32.mxu0 0.0
        %846 = vmatmul.mubr.f32.gmra.mrb[0].mxu0 %v639
        %v847 = vpop.f32.mrb[0].mxu0
        %v848 = vadd.f32 %v698, %v847
        %v849 = vpop.f32.mrb[0].mxu0
        %v850 = vadd.f32 %v698, %v849
        %851 = vmatprep.mubr.f32.mxu0 0.0
        %852 = vmatmul.mubr.f32.gmra.mrb[0].mxu0 %v640
        %v853 = vpop.f32.mrb[0].mxu0
        %v854 = vadd.f32 %v703, %v853
        %v855 = vpop.f32.mrb[0].mxu0
        %v856 = vadd.f32 %v703, %v855
        %857 = vmatprep.mubr.f32.mxu0 0.0
        %858 = vmatmul.mubr.f32.gmra.mrb[0].mxu0 %v641
        %v859 = vpop.f32.mrb[0].mxu0
        %v860 = vadd.f32 %v708, %v859
        %v861 = vpop.f32.mrb[0].mxu0
        %v862 = vadd.f32 %v708, %v861
        %863 = vmatprep.mubr.f32.mxu0 0.0
        %864 = vmatmul.mubr.f32.gmra.mrb[0].mxu0 %v642
        %v865 = vpop.f32.mrb[0].mxu0
        %v866 = vadd.f32 %v713, %v865
        %v867 = vpop.f32.mrb[0].mxu0
        %v868 = vadd.f32 %v713, %v867
        %869 = vmatprep.mubr.f32.mxu0 0.0
        %870 = vmatmul.mubr.f32.gmra.mrb[0].mxu0 %v643
        %v871 = vpop.f32.mrb[0].mxu0
        %v872 = vadd.f32 %v718, %v871
        %v873 = vpop.f32.mrb[0].mxu0
        %v874 = vadd.f32 %v718, %v873
        %875 = vmatprep.mubr.f32.mxu0 0.0
        %876 = vmatmul.mubr.f32.gmra.mrb[0].mxu0 %v644
        %v877 = vpop.f32.mrb[0].mxu0
        %v878 = vadd.f32 %v723, %v877
        %v879 = vpop.f32.mrb[0].mxu0
        %v880 = vadd.f32 %v723, %v879
        %881 = vmatprep.mubr.f32.mxu0 0.0
        %882 = vmatmul.mubr.f32.gmra.mrb[0].mxu0 %v645
        %v883 = vpop.f32.mrb[0].mxu0
        %v884 = vadd.f32 %v728, %v883
        %v885 = vpop.f32.mrb[0].mxu0
        %v886 = vadd.f32 %v728, %v885
        %887 = vmatprep.mubr.f32.mxu0 0.0
        %888 = vmatmul.mubr.f32.gmra.mrb[0].mxu0 %v646
        %v889 = vpop.f32.mrb[0].mxu0
        %v890 = vadd.f32 %v733, %v889
        %v891 = vpop.f32.mrb[0].mxu0
        %v892 = vadd.f32 %v733, %v891
        %893 = vmatprep.mubr.f32.mxu0 0.0
        %894 = vmatmul.mubr.f32.gmra.mrb[0].mxu0 %v647
        %v895 = vpop.f32.mrb[0].mxu0
        %v896 = vadd.f32 %v738, %v895
        %v897 = vpop.f32.mrb[0].mxu0
        %v898 = vadd.f32 %v738, %v897
        %899 = vmatprep.mubr.f32.mxu0 0.0
        %900 = vmatmul.mubr.f32.gmra.mrb[0].mxu0 %v648
        %v901 = vpop.f32.mrb[0].mxu0
        %v902 = vadd.f32 %v743, %v901
        %v903 = vpop.f32.mrb[0].mxu0
        %v904 = vadd.f32 %v743, %v903
        %905 = vdwg.mxu0
        %v906 = vmax.f32 %v812, 0.0
        %v907 = vmax.f32 %v814, 0.0
        %v908 = vmax.f32 %v818, 0.0
        %v909 = vmax.f32 %v820, 0.0
        %v910 = vmax.f32 %v824, 0.0
        %v911 = vmax.f32 %v826, 0.0
        %v912 = vmax.f32 %v830, 0.0
        %v913 = vmax.f32 %v832, 0.0
        %v914 = vmax.f32 %v836, 0.0
        %v915 = vmax.f32 %v838, 0.0
        %v916 = vmax.f32 %v842, 0.0
        %v917 = vmax.f32 %v844, 0.0
        %v918 = vmax.f32 %v848, 0.0
        %v919 = vmax.f32 %v850, 0.0
        %v920 = vmax.f32 %v854, 0.0
        %v921 = vmax.f32 %v856, 0.0
        %v922 = vmax.f32 %v860, 0.0
        %v923 = vmax.f32 %v862, 0.0
        %v924 = vmax.f32 %v866, 0.0
        %v925 = vmax.f32 %v868, 0.0
        %v926 = vmax.f32 %v872, 0.0
        %v927 = vmax.f32 %v874, 0.0
        %v928 = vmax.f32 %v878, 0.0
        %v929 = vmax.f32 %v880, 0.0
        %v930 = vmax.f32 %v884, 0.0
        %v931 = vmax.f32 %v886, 0.0
        %v932 = vmax.f32 %v890, 0.0
        %v933 = vmax.f32 %v892, 0.0
        %v934 = vmax.f32 %v896, 0.0
        %v935 = vmax.f32 %v898, 0.0
        %v936 = vmax.f32 %v902, 0.0
        %v937 = vmax.f32 %v904, 0.0
        %v938 = vld [vmem:[%s5] sm:$0xff]
        %v939 = vld [vmem:[%s5 + $0x8] sm:$0xff]
        %v940 = vld [vmem:[%s5 + $0x10] sm:$0xff]
        %v941 = vld [vmem:[%s5 + $0x18] sm:$0xff]
        %v942 = vld [vmem:[%s5 + $0x20] sm:$0xff]
        %v943 = vld [vmem:[%s5 + $0x28] sm:$0xff]
        %v944 = vld [vmem:[%s5 + $0x30] sm:$0xff]
        %v945 = vld [vmem:[%s5 + $0x38] sm:$0xff]
        %v946 = vld [vmem:[%s6] sm:$0xff]
        %v947 = vld [vmem:[%s6 + $0x8] sm:$0xff]
        %v948 = vld [vmem:[%s6 + $0x10] sm:$0xff]
        %v949 = vld [vmem:[%s6 + $0x18] sm:$0xff]
        %v950 = vld [vmem:[%s6 + $0x20] sm:$0xff]
        %v951 = vld [vmem:[%s6 + $0x28] sm:$0xff]
        %v952 = vld [vmem:[%s6 + $0x30] sm:$0xff]
        %v953 = vld [vmem:[%s6 + $0x38] sm:$0xff]
        %955 = vset.pattern.permute.xlu0 0
        %956 = vperm.xlu0 %955, %v946
        %v957 = vpop.permute.xlu0 %956
        %960 = vset.pattern.permute.xlu0 0
        %961 = vperm.xlu0 %960, %v947
        %v962 = vpop.permute.xlu0 %961
        %965 = vset.pattern.permute.xlu0 0
        %966 = vperm.xlu0 %965, %v948
        %v967 = vpop.permute.xlu0 %966
        %970 = vset.pattern.permute.xlu0 0
        %971 = vperm.xlu0 %970, %v949
        %v972 = vpop.permute.xlu0 %971
        %975 = vset.pattern.permute.xlu0 0
        %976 = vperm.xlu0 %975, %v950
        %v977 = vpop.permute.xlu0 %976
        %980 = vset.pattern.permute.xlu0 0
        %981 = vperm.xlu0 %980, %v951
        %v982 = vpop.permute.xlu0 %981
        %985 = vset.pattern.permute.xlu0 0
        %986 = vperm.xlu0 %985, %v952
        %v987 = vpop.permute.xlu0 %986
        %990 = vset.pattern.permute.xlu0 0
        %991 = vperm.xlu0 %990, %v953
        %v992 = vpop.permute.xlu0 %991
        %994 = vmatprep.subr.mxu0 %v907
        %995 = vmatpush1.msra.mxu0 %v906
        %996 = vmatprep.subr.mxu0 %v909
        %997 = vmatpush1.msra.mxu0 %v908
        %998 = vmatprep.subr.mxu0 %v911
        %999 = vmatpush1.msra.mxu0 %v910
        %1000 = vmatprep.subr.mxu0 %v913
        %1001 = vmatpush1.msra.mxu0 %v912
        %1002 = vmatprep.subr.mxu0 %v915
        %1003 = vmatpush1.msra.mxu0 %v914
        %1004 = vmatprep.subr.mxu0 %v917
        %1005 = vmatpush1.msra.mxu0 %v916
        %1006 = vmatprep.subr.mxu0 %v919
        %1007 = vmatpush1.msra.mxu0 %v918
        %1008 = vmatprep.subr.mxu0 %v921
        %1009 = vmatpush1.msra.mxu0 %v920
        %1010 = vmatprep.subr.mxu0 %v923
        %1011 = vmatpush1.msra.mxu0 %v922
        %1012 = vmatprep.subr.mxu0 %v925
        %1013 = vmatpush1.msra.mxu0 %v924
        %1014 = vmatprep.subr.mxu0 %v927
        %1015 = vmatpush1.msra.mxu0 %v926
        %1016 = vmatprep.subr.mxu0 %v929
        %1017 = vmatpush1.msra.mxu0 %v928
        %1018 = vmatprep.subr.mxu0 %v931
        %1019 = vmatpush1.msra.mxu0 %v930
        %1020 = vmatprep.subr.mxu0 %v933
        %1021 = vmatpush1.msra.mxu0 %v932
        %1022 = vmatprep.subr.mxu0 %v935
        %1023 = vmatpush1.msra.mxu0 %v934
        %1024 = vmatprep.subr.mxu0 %v937
        %1025 = vmatpush1.msra.mxu0 %v936
        %1026 = vmatprep.subr.mxu0 0.0
        %1027 = vmatpush1.msra.mxu0 0.0
        %1028 = vmatprep.subr.mxu0 0.0
        %1029 = vmatpush1.msra.mxu0 0.0
        %1030 = vmatprep.subr.mxu0 0.0
        %1031 = vmatpush1.msra.mxu0 0.0
        %1032 = vmatprep.subr.mxu0 0.0
        %1033 = vmatpush1.msra.mxu0 0.0
        %1034 = vmatprep.subr.mxu0 0.0
        %1035 = vmatpush1.msra.mxu0 0.0
        %1036 = vmatprep.subr.mxu0 0.0
        %1037 = vmatpush1.msra.mxu0 0.0
        %1038 = vmatprep.subr.mxu0 0.0
        %1039 = vmatpush1.msra.mxu0 0.0
        %1040 = vmatprep.subr.mxu0 0.0
        %1041 = vmatpush1.msra.mxu0 0.0
        %1042 = vmatprep.subr.mxu0 0.0
        %1043 = vmatpush1.msra.mxu0 0.0
        %1044 = vmatprep.subr.mxu0 0.0
        %1045 = vmatpush1.msra.mxu0 0.0
        %1046 = vmatprep.subr.mxu0 0.0
        %1047 = vmatpush1.msra.mxu0 0.0
        %1048 = vmatprep.subr.mxu0 0.0
        %1049 = vmatpush1.msra.mxu0 0.0
        %1050 = vmatprep.subr.mxu0 0.0
        %1051 = vmatpush1.msra.mxu0 0.0
        %1052 = vmatprep.subr.mxu0 0.0
        %1053 = vmatpush1.msra.mxu0 0.0
        %1054 = vmatprep.subr.mxu0 0.0
        %1055 = vmatpush1.msra.mxu0 0.0
        %1056 = vmatprep.subr.mxu0 0.0
        %1057 = vmatpush1.msra.mxu0 0.0
        %1058 = vmatprep.mubr.f32.mxu0 0.0
        %1059 = vmatmul.mubr.f32.gmra.mrb[0].mxu0 %v938
        %v1060 = vpop.f32.mrb[0].mxu0
        %v1061 = vadd.f32 %v957, %v1060
        %v1062 = vpop.f32.mrb[0].mxu0
        %v1063 = vadd.f32 %v957, %v1062
        %1064 = vmatprep.mubr.f32.mxu0 0.0
        %1065 = vmatmul.mubr.f32.gmra.mrb[0].mxu0 %v939
        %v1066 = vpop.f32.mrb[0].mxu0
        %v1067 = vadd.f32 %v962, %v1066
        %v1068 = vpop.f32.mrb[0].mxu0
        %v1069 = vadd.f32 %v962, %v1068
        %1070 = vmatprep.mubr.f32.mxu0 0.0
        %1071 = vmatmul.mubr.f32.gmra.mrb[0].mxu0 %v940
        %v1072 = vpop.f32.mrb[0].mxu0
        %v1073 = vadd.f32 %v967, %v1072
        %v1074 = vpop.f32.mrb[0].mxu0
        %v1075 = vadd.f32 %v967, %v1074
        %1076 = vmatprep.mubr.f32.mxu0 0.0
        %1077 = vmatmul.mubr.f32.gmra.mrb[0].mxu0 %v941
        %v1078 = vpop.f32.mrb[0].mxu0
        %v1079 = vadd.f32 %v972, %v1078
        %v1080 = vpop.f32.mrb[0].mxu0
        %v1081 = vadd.f32 %v972, %v1080
        %1082 = vmatprep.mubr.f32.mxu0 0.0
        %1083 = vmatmul.mubr.f32.gmra.mrb[0].mxu0 %v942
        %v1084 = vpop.f32.mrb[0].mxu0
        %v1085 = vadd.f32 %v977, %v1084
        %v1086 = vpop.f32.mrb[0].mxu0
        %v1087 = vadd.f32 %v977, %v1086
        %1088 = vmatprep.mubr.f32.mxu0 0.0
        %1089 = vmatmul.mubr.f32.gmra.mrb[0].mxu0 %v943
        %v1090 = vpop.f32.mrb[0].mxu0
        %v1091 = vadd.f32 %v982, %v1090
        %v1092 = vpop.f32.mrb[0].mxu0
        %v1093 = vadd.f32 %v982, %v1092
        %1094 = vmatprep.mubr.f32.mxu0 0.0
        %1095 = vmatmul.mubr.f32.gmra.mrb[0].mxu0 %v944
        %v1096 = vpop.f32.mrb[0].mxu0
        %v1097 = vadd.f32 %v987, %v1096
        %v1098 = vpop.f32.mrb[0].mxu0
        %v1099 = vadd.f32 %v987, %v1098
        %1100 = vmatprep.mubr.f32.mxu0 0.0
        %1101 = vmatmul.mubr.f32.gmra.mrb[0].mxu0 %v945
        %v1102 = vpop.f32.mrb[0].mxu0
        %v1103 = vadd.f32 %v992, %v1102
        %v1104 = vpop.f32.mrb[0].mxu0
        %v1105 = vadd.f32 %v992, %v1104
        %1106 = vdwg.mxu0
        %v1107 = vmax.f32 %v1061, 0.0
        %v1108 = vmax.f32 %v1063, 0.0
        %v1109 = vmax.f32 %v1067, 0.0
        %v1110 = vmax.f32 %v1069, 0.0
        %v1111 = vmax.f32 %v1073, 0.0
        %v1112 = vmax.f32 %v1075, 0.0
        %v1113 = vmax.f32 %v1079, 0.0
        %v1114 = vmax.f32 %v1081, 0.0
        %v1115 = vmax.f32 %v1085, 0.0
        %v1116 = vmax.f32 %v1087, 0.0
        %v1117 = vmax.f32 %v1091, 0.0
        %v1118 = vmax.f32 %v1093, 0.0
        %v1119 = vmax.f32 %v1097, 0.0
        %v1120 = vmax.f32 %v1099, 0.0
        %v1121 = vmax.f32 %v1103, 0.0
        %v1122 = vmax.f32 %v1105, 0.0
        %v1123 = vld [vmem:[%s7] sm:$0xff]
        %v1124 = vld [vmem:[%s7 + $0x8] sm:$0xff]
        %v1125 = vld [vmem:[%s7 + $0x10] sm:$0xff]
        %v1126 = vld [vmem:[%s7 + $0x18] sm:$0xff]
        %v1127 = vld [vmem:[%s7 + $0x20] sm:$0xff]
        %v1128 = vld [vmem:[%s7 + $0x28] sm:$0xff]
        %v1129 = vld [vmem:[%s7 + $0x30] sm:$0xff]
        %v1130 = vld [vmem:[%s7 + $0x38] sm:$0xff]
        %1132 = vset.pattern.permute.xlu0 0
        %1133 = vperm.xlu0 %1132, %v1123
        %v1134 = vpop.permute.xlu0 %1133
        %1137 = vset.pattern.permute.xlu0 0
        %1138 = vperm.xlu0 %1137, %v1124
        %v1139 = vpop.permute.xlu0 %1138
        %1142 = vset.pattern.permute.xlu0 0
        %1143 = vperm.xlu0 %1142, %v1125
        %v1144 = vpop.permute.xlu0 %1143
        %1147 = vset.pattern.permute.xlu0 0
        %1148 = vperm.xlu0 %1147, %v1126
        %v1149 = vpop.permute.xlu0 %1148
        %1152 = vset.pattern.permute.xlu0 0
        %1153 = vperm.xlu0 %1152, %v1127
        %v1154 = vpop.permute.xlu0 %1153
        %1157 = vset.pattern.permute.xlu0 0
        %1158 = vperm.xlu0 %1157, %v1128
        %v1159 = vpop.permute.xlu0 %1158
        %1162 = vset.pattern.permute.xlu0 0
        %1163 = vperm.xlu0 %1162, %v1129
        %v1164 = vpop.permute.xlu0 %1163
        %1167 = vset.pattern.permute.xlu0 0
        %1168 = vperm.xlu0 %1167, %v1130
        %v1169 = vpop.permute.xlu0 %1168
        %v1171 = vmul.f32 %v1134, %v1107
        %v1172 = vmul.f32 %v1134, %v1108
        %v1173 = vmul.f32 %v1139, %v1109
        %v1174 = vmul.f32 %v1139, %v1110
        %v1175 = vmul.f32 %v1144, %v1111
        %v1176 = vmul.f32 %v1144, %v1112
        %v1177 = vmul.f32 %v1149, %v1113
        %v1178 = vmul.f32 %v1149, %v1114
        %v1179 = vmul.f32 %v1154, %v1115
        %v1180 = vmul.f32 %v1154, %v1116
        %v1181 = vmul.f32 %v1159, %v1117
        %v1182 = vmul.f32 %v1159, %v1118
        %v1183 = vmul.f32 %v1164, %v1119
        %v1184 = vmul.f32 %v1164, %v1120
        %v1185 = vmul.f32 %v1169, %v1121
        %v1186 = vmul.f32 %v1169, %v1122
        %v1187 = vadd.f32 %v1171, %v1173
        %v1188 = vadd.f32 %v1187, %v1175
        %v1189 = vadd.f32 %v1188, %v1177
        %v1190 = vadd.f32 %v1189, %v1179
        %v1191 = vadd.f32 %v1190, %v1181
        %v1192 = vadd.f32 %v1191, %v1183
        %v1193 = vadd.f32 %v1192, %v1185
        %v1194 = vrot.slane %v1193, 4
        %v1195 = vadd.f32 %v1193, %v1194
        %v1196 = vrot.slane %v1195, 2
        %v1197 = vadd.f32 %v1195, %v1196
        %v1198 = vrot.slane %v1197, 1
        %v1199 = vadd.f32 %v1197, %v1198
        %v1200 = vadd.f32 %v1172, %v1174
        %v1201 = vadd.f32 %v1200, %v1176
        %v1202 = vadd.f32 %v1201, %v1178
        %v1203 = vadd.f32 %v1202, %v1180
        %v1204 = vadd.f32 %v1203, %v1182
        %v1205 = vadd.f32 %v1204, %v1184
        %v1206 = vadd.f32 %v1205, %v1186
        %v1207 = vrot.slane %v1206, 4
        %v1208 = vadd.f32 %v1206, %v1207
        %v1209 = vrot.slane %v1208, 2
        %v1210 = vadd.f32 %v1208, %v1209
        %v1211 = vrot.slane %v1210, 1
        %v1212 = vadd.f32 %v1210, %v1211
        %v1213 = vld [vmem:[#allocation2] sm:$0x1]
        %1215 = vset.pattern.permute.xlu0 0
        %1216 = vperm.xlu0 %1215, %v1213
        %v1217 = vpop.permute.xlu0 %1216
        %v1219 = vlaneseq
        %v1220 = vshrl.u32 %v1219, 7
        %v1221 = vsub.s32 0, %v1220
        %v1222 = vrot.slane %v1217, %v1221
        %v1223 = vadd.f32 %v1199, %v1222
        %v1224 = vadd.f32 %v1212, %v1222
        %v1227 = vcombine.low %v1223, %v1224
        %v1229 = vunpack.c.l.s4 1966171168
        %v1230 = vunpack.c.0.s8 %v1229
        %v1231 = vlaneseq
        %v1232 = vshrl.u32 %v1231, 7
        %v1233 = vsub.s32 %v1230, %v1232
        %v1234 = vrot.slane %v1227, %v1233
        %v1236 = vunpack.c.l.s4 1966171168
        %v1237 = vunpack.c.0.s8 %v1236
        %v1238 = vlaneseq
        %v1239 = vshrl.u32 %v1238, 7
        %v1240 = vsub.s32 %v1237, %v1239
        %v1241 = vrot.slane %v1234, %v1240
        %v1243 = vlaneseq
        %vm1244 = vcmp.ge.s32.totalorder %v1243, 0
        %vm1245 = vcmp.lt.s32.totalorder %v1243, 256
        %vm1246 = vmand %vm1244, %vm1245
        %1247 = vst.msk [vmem:[%s326] sm:$0x3] %vm1246, %v1241
        %s1248 = sand.u32 %s227, 1
        %s1249 = scalar_lea.sflag [#allocation4], %s1248
        %s1250 = sand.u32 %s227, 1
        %s1251 = smul.addr %s1250, 2
        %s1252 = scalar_lea.vmem [#allocation3], %s1251
        // Predicated region
        $region57: #{tpu_custom_call.1} parent=55 // pred_check
          %p1253 = pneg %p237
        $region58: #{tpu_custom_call.1} parent=55 // pred_check_branch
          %1255 = sbr.rel (%p1253) target = $region60
        $region59: #{tpu_custom_call.1} parent=55 // pred_region
          %s1256 = smul.u32 2, %s25
          %s1258 = ssub.s32 32, 32
          %1259 = vsyncadd %s1249, %s1258
          %s1260 = smul.addr %s1256, 16
          %s1261 = scalar_lea.hbm %s9, %s1260
          %s1263 = sshll.u32 %s1252, 4
          %s1264 = int_to_ptr.vmem [resolvable:$true] %s1263
          %1266 = dma.vmem_to_hbm [thread:$0]  %s1264, 32, %s1261, %s1249
        $region60: #{tpu_custom_call.1} parent=55 // pred_fallthru
          _
      $region56: #{tpu_custom_call.1} parent=5 // pred_fallthru
        _
      %p1267 = scmp.le.s32.totalorder 2, %s20
      // Predicated region
      $region61: #{tpu_custom_call.1} parent=5 // pred_check
        %p1268 = pneg %p1267
      $region62: #{tpu_custom_call.1} parent=5 // pred_check_branch
        %1270 = sbr.rel (%p1268) target = $region64
      $region63: #{tpu_custom_call.1} parent=5 // pred_region
        %s1271 = ssub.s32 %s20, 2
        // Predicated region
        $region65: #{tpu_custom_call.1} parent=63 // pred_check
          %p1272 = pneg %p243
        $region66: #{tpu_custom_call.1} parent=63 // pred_check_branch
          %1274 = sbr.rel (%p1272) target = $region68
        $region67: #{tpu_custom_call.1} parent=63 // pred_region
          %s1275 = sand.u32 %s228, 1
          %s1276 = scalar_lea.sflag [#allocation4], %s1275
          %s1277 = sand.u32 %s228, 1
          %s1278 = smul.addr %s1277, 2
          %s1279 = scalar_lea.vmem [#allocation3], %s1278
          %1280 = dma.done %s1276, 32
        $region68: #{tpu_custom_call.1} parent=63 // pred_fallthru
          _
      $region64: #{tpu_custom_call.1} parent=5 // pred_fallthru
        _
    $region6: #{tpu_custom_call.1} parent=1 // loop_footer
      %s24 = sadd.s32 1, %s20
    $region7: #{tpu_custom_call.1} parent=1 // loop_footer_branch
      %19 = sbr.rel target = $region3
    $region8: #{tpu_custom_call.1} parent=1 // loop_exit
      _
    %1281 = vsyncpa [#allocation4], 1
    %s1282 = scalar_lea.sflag [#allocation4], 1
    %1283 = vsyncpa %s1282, 1

</llo_original>
